<compile_context>
chip_gen: v5e
topology: v5e:2x2
jax: 0.10.0
libtpu: 0.0.40
codegen_flags: <defaults>
</compile_context>

<pallas_src>
import jax
import jax.numpy as jnp
import numpy as np
from jax.experimental import pallas as pl
from jax.experimental.pallas import tpu as pltpu

H, W = 16, 16                 # input spatial size
HO1 = (H - 3) // 2 + 1        # 7  (3x3 conv, stride 2, VALID)
WO1 = (W - 3) // 2 + 1        # 7
HO2 = HO1 - 2                 # 5  (3x3 conv, stride 1, VALID)
WO2 = WO1 - 2                 # 5
C2 = 6                        # out-channels of layer1's 3x3 conv
LANES = 128                   # vreg lane width
BLK = 16                      # one image row per lane block; 8 blocks per row


def qrnet_kernel(x_ref, w1_ref, b1_ref, w2l_ref, b2l_ref, w3l_ref,
                 b3_ref, w4_ref, b4_ref, o_ref):
    # ---- layer1[0]: 1x1 conv (3 -> 1) + ReLU (pointwise) -----------------
    a = (w1_ref[0] * x_ref[0] + w1_ref[1] * x_ref[1] + w1_ref[2] * x_ref[2]
         + b1_ref[0])
    a = jnp.maximum(a, 0.0)                      # (16, 128), rows tiled 8x on lanes

    # ---- layer1[2]: 3x3 conv, stride 2, 1 -> 6, + ReLU --------------------
    # Dilated coords: valid outputs sit at even (row, lane-within-block).
    # tap(ki,kj)[r, L] = a[r+ki, L+kj]; channel oc occupies lanes [16oc, 16oc+16).
    # Lane shifts are shared across the 3 kernel rows (2 lane + 2 row rolls).
    a_cols = [a, jnp.roll(a, -1, axis=1), jnp.roll(a, -2, axis=1)]
    row_parts = []
    for ki in range(3):
        s = w2l_ref[pl.ds(ki * 3 + 0, 1), :] * a_cols[0]
        s = s + w2l_ref[pl.ds(ki * 3 + 1, 1), :] * a_cols[1]
        s = s + w2l_ref[pl.ds(ki * 3 + 2, 1), :] * a_cols[2]
        row_parts.append(s)
    acc = (row_parts[0]
           + jnp.roll(row_parts[1], -1, axis=0)
           + jnp.roll(row_parts[2], -2, axis=0))
    feats = jnp.maximum(acc + b2l_ref[...], 0.0)  # (16,128): 6 channels on lanes

    # ---- layer2[0]: 1x1 conv (6 -> 1) + ReLU = lane-block tree reduction --
    cw = feats * w3l_ref[...]                     # per-channel scale (blocks 6,7 = 0)
    cw = cw + jnp.roll(cw, 64, axis=1)
    cw = cw + jnp.roll(cw, 32, axis=1)
    cw = cw + jnp.roll(cw, 16, axis=1)            # every 16-lane block = channel sum
    c = jnp.maximum(cw + b3_ref[0], 0.0)

    # ---- layer2[2]: 3x3 conv, stride 1 (stride 2 in dilated coords) -------
    c_cols = [c, jnp.roll(c, -2, axis=1), jnp.roll(c, -4, axis=1)]
    parts = []
    for ki in range(3):
        t = w4_ref[ki * 3 + 0] * c_cols[0]
        t = t + w4_ref[ki * 3 + 1] * c_cols[1]
        t = t + w4_ref[ki * 3 + 2] * c_cols[2]
        parts.append(t)
    out = (parts[0]
           + jnp.roll(parts[1], -2, axis=0)
           + jnp.roll(parts[2], -4, axis=0))
    o_ref[...] = out + b4_ref[0]                  # valid at rows/lanes 0,2,...,8


def qrnet_forward(x, params):
    """x: (N, 3, H, W) float32. Returns (HO2*WO2, 1), matching out.view(-1, 1)."""
    w1, b1, w2, b2, w3, b3, w4, b4 = params
    f32 = jnp.float32
    n_blk = LANES // BLK                             # 8

    x0 = x[0].astype(f32)                            # torch forward uses x[0] only
    x_tiled = jnp.tile(x0, (1, 1, n_blk))            # (3, 16, 128), lane-dense input

    # Lane-broadcast weight rows: channel oc occupies lanes [16*oc, 16*oc+16).
    w2r = w2.reshape(C2, 9).astype(f32)              # (oc, tap = ki*3+kj)
    pad = LANES - C2 * BLK
    w2_lanes = jnp.pad(jnp.repeat(w2r.T, BLK, axis=1), ((0, 0), (0, pad)))   # (9,128)
    b2_lanes = jnp.pad(jnp.repeat(b2.reshape(-1).astype(f32), BLK),
                       (0, pad)).reshape(1, LANES)
    w3_lanes = jnp.pad(jnp.repeat(w3.reshape(-1).astype(f32), BLK),
                       (0, pad)).reshape(1, LANES)

    smem = pl.BlockSpec(memory_space=pltpu.MemorySpace.SMEM)
    vmem = pl.BlockSpec(memory_space=pltpu.MemorySpace.VMEM)

    out_block = pl.pallas_call(
        qrnet_kernel,
        out_shape=jax.ShapeDtypeStruct((H, LANES), jnp.float32),
        in_specs=[vmem, smem, smem, vmem, vmem, vmem, smem, smem, smem],
        out_specs=vmem,
    )(x_tiled,
      w1.reshape(-1).astype(f32), b1.reshape(-1).astype(f32),
      w2_lanes, b2_lanes, w3_lanes,
      b3.reshape(-1).astype(f32),
      w4.reshape(-1).astype(f32), b4.reshape(-1).astype(f32))

    # Valid results are at dilated rows/lanes 0, 2, ..., 2*(HO2-1) of block 0.
    out = out_block[0:2 * HO2:2, 0:2 * WO2:2]        # (5, 5), extracted in XLA
    return out.reshape(-1, 1)


def _torch_like_conv(x, w, b, stride):
    y = jax.lax.conv_general_dilated(
        x, w, (stride, stride), 'VALID',
        dimension_numbers=('NCHW', 'OIHW', 'NCHW'),
        precision=jax.lax.Precision.HIGHEST)
    return y + b[None, :, None, None]


def reference_forward(x, params):
    w1, b1, w2, b2, w3, b3, w4, b4 = params
    h = x[0][None]                                    # (1, 3, H, W)
    h = jnp.maximum(_torch_like_conv(h, w1, b1, 1), 0.0)
    h = jnp.maximum(_torch_like_conv(h, w2, b2, 2), 0.0)
    h = jnp.maximum(_torch_like_conv(h, w3, b3, 1), 0.0)
    h = _torch_like_conv(h, w4, b4, 1)
    return h.reshape(-1, 1)


def init_params(key):
    ks = jax.random.split(key, 8)

    def u(k, shape, fan_in):
        bound = 1.0 / np.sqrt(fan_in)
        return jax.random.uniform(k, shape, jnp.float32, -bound, bound)

    w1 = u(ks[0], (1, 3, 1, 1), 3)   # Conv2d(3, 1, 1)
    b1 = u(ks[1], (1,), 3)
    w2 = u(ks[2], (6, 1, 3, 3), 9)   # Conv2d(1, 6, 3, stride=2)
    b2 = u(ks[3], (6,), 9)
    w3 = u(ks[4], (1, 6, 1, 1), 6)   # Conv2d(6, 1, 1)
    b3 = u(ks[5], (1,), 6)
    w4 = u(ks[6], (1, 1, 3, 3), 9)   # Conv2d(1, 1, 3)
    b4 = u(ks[7], (1,), 9)
    return (w1, b1, w2, b2, w3, b3, w4, b4)


if __name__ == "__main__":
    key = jax.random.PRNGKey(0)
    pk, xk = jax.random.split(key)
    params = init_params(pk)
    x = jax.random.normal(xk, (2, 3, H, W), jnp.float32)

    fwd = jax.jit(qrnet_forward)
    out = jax.block_until_ready(fwd(x, params))

    ref = reference_forward(x, params)
    assert out.shape == (HO2 * WO2, 1), out.shape
    np.testing.assert_allclose(np.asarray(out), np.asarray(ref),
                               rtol=1e-3, atol=1e-3)
    print("KERNEL_OK")
</pallas_src>

<mosaic_0001>
module attributes {stable_mosaic.version = 11 : i64} {
  func.func @qrnet_kernel(%arg0: memref<3x16x128xf32, #tpu.memory_space<vmem>>, %arg1: memref<3xf32, #tpu.memory_space<smem>>, %arg2: memref<1xf32, #tpu.memory_space<smem>>, %arg3: memref<9x128xf32, #tpu.memory_space<vmem>>, %arg4: memref<1x128xf32, #tpu.memory_space<vmem>>, %arg5: memref<1x128xf32, #tpu.memory_space<vmem>>, %arg6: memref<1xf32, #tpu.memory_space<smem>>, %arg7: memref<9xf32, #tpu.memory_space<smem>>, %arg8: memref<1xf32, #tpu.memory_space<smem>>, %arg9: memref<16x128xf32, #tpu.memory_space<vmem>>) attributes {dimension_semantics = [], scalar_prefetch = 0 : i64, scratch_operands = 0 : i64, tpu.core_type = #tpu.core_type<tc>} {
    %c0 = arith.constant 0 : index
    %0 = memref.load %arg1[%c0] : memref<3xf32, #tpu.memory_space<smem>>
    %c0_0 = arith.constant 0 : index
    %c0_1 = arith.constant 0 : index
    %c0_2 = arith.constant 0 : index
    %1 = vector.load %arg0[%c0_0, %c0_1, %c0_2] : memref<3x16x128xf32, #tpu.memory_space<vmem>>, vector<1x16x128xf32>
    %2 = vector.shape_cast %1 : vector<1x16x128xf32> to vector<16x128xf32>
    %3 = vector.broadcast %0 : f32 to vector<16x128xf32>
    %4 = arith.mulf %3, %2 : vector<16x128xf32>
    %c1 = arith.constant 1 : index
    %5 = memref.load %arg1[%c1] : memref<3xf32, #tpu.memory_space<smem>>
    %c1_3 = arith.constant 1 : index
    %c0_4 = arith.constant 0 : index
    %c0_5 = arith.constant 0 : index
    %6 = vector.load %arg0[%c1_3, %c0_4, %c0_5] : memref<3x16x128xf32, #tpu.memory_space<vmem>>, vector<1x16x128xf32>
    %7 = vector.shape_cast %6 : vector<1x16x128xf32> to vector<16x128xf32>
    %8 = vector.broadcast %5 : f32 to vector<16x128xf32>
    %9 = arith.mulf %8, %7 : vector<16x128xf32>
    %10 = arith.addf %4, %9 : vector<16x128xf32>
    %c2 = arith.constant 2 : index
    %11 = memref.load %arg1[%c2] : memref<3xf32, #tpu.memory_space<smem>>
    %c2_6 = arith.constant 2 : index
    %c0_7 = arith.constant 0 : index
    %c0_8 = arith.constant 0 : index
    %12 = vector.load %arg0[%c2_6, %c0_7, %c0_8] : memref<3x16x128xf32, #tpu.memory_space<vmem>>, vector<1x16x128xf32>
    %13 = vector.shape_cast %12 : vector<1x16x128xf32> to vector<16x128xf32>
    %14 = vector.broadcast %11 : f32 to vector<16x128xf32>
    %15 = arith.mulf %14, %13 : vector<16x128xf32>
    %16 = arith.addf %10, %15 : vector<16x128xf32>
    %c0_9 = arith.constant 0 : index
    %17 = memref.load %arg2[%c0_9] : memref<1xf32, #tpu.memory_space<smem>>
    %18 = vector.broadcast %17 : f32 to vector<16x128xf32>
    %19 = arith.addf %16, %18 : vector<16x128xf32>
    %cst = arith.constant 0.000000e+00 : f32
    %20 = vector.broadcast %cst : f32 to vector<16x128xf32>
    %21 = arith.maximumf %19, %20 : vector<16x128xf32>
    %22 = vector.extract_strided_slice %21 {offsets = [0, 1], sizes = [16, 127], strides = [1, 1]} : vector<16x128xf32> to vector<16x127xf32>
    %23 = vector.extract_strided_slice %21 {offsets = [0, 0], sizes = [16, 1], strides = [1, 1]} : vector<16x128xf32> to vector<16x1xf32>
    %24 = tpu.concatenate %22, %23 in 1 : vector<16x127xf32>, vector<16x1xf32> -> vector<16x128xf32>
    %25 = vector.extract_strided_slice %21 {offsets = [0, 2], sizes = [16, 126], strides = [1, 1]} : vector<16x128xf32> to vector<16x126xf32>
    %26 = vector.extract_strided_slice %21 {offsets = [0, 0], sizes = [16, 2], strides = [1, 1]} : vector<16x128xf32> to vector<16x2xf32>
    %27 = tpu.concatenate %25, %26 in 1 : vector<16x126xf32>, vector<16x2xf32> -> vector<16x128xf32>
    %c0_10 = arith.constant 0 : index
    %c0_11 = arith.constant 0 : index
    %28 = vector.load %arg3[%c0_10, %c0_11] : memref<9x128xf32, #tpu.memory_space<vmem>>, vector<1x128xf32>
    %29 = vector.broadcast %28 : vector<1x128xf32> to vector<16x128xf32>
    %30 = arith.mulf %29, %21 : vector<16x128xf32>
    %c1_12 = arith.constant 1 : index
    %c0_13 = arith.constant 0 : index
    %31 = vector.load %arg3[%c1_12, %c0_13] : memref<9x128xf32, #tpu.memory_space<vmem>>, vector<1x128xf32>
    %32 = vector.broadcast %31 : vector<1x128xf32> to vector<16x128xf32>
    %33 = arith.mulf %32, %24 : vector<16x128xf32>
    %34 = arith.addf %30, %33 : vector<16x128xf32>
    %c2_14 = arith.constant 2 : index
    %c0_15 = arith.constant 0 : index
    %35 = vector.load %arg3[%c2_14, %c0_15] : memref<9x128xf32, #tpu.memory_space<vmem>>, vector<1x128xf32>
    %36 = vector.broadcast %35 : vector<1x128xf32> to vector<16x128xf32>
    %37 = arith.mulf %36, %27 : vector<16x128xf32>
    %38 = arith.addf %34, %37 : vector<16x128xf32>
    %c3 = arith.constant 3 : index
    %c0_16 = arith.constant 0 : index
    %39 = vector.load %arg3[%c3, %c0_16] : memref<9x128xf32, #tpu.memory_space<vmem>>, vector<1x128xf32>
    %40 = vector.broadcast %39 : vector<1x128xf32> to vector<16x128xf32>
    %41 = arith.mulf %40, %21 : vector<16x128xf32>
    %c4 = arith.constant 4 : index
    %c0_17 = arith.constant 0 : index
    %42 = vector.load %arg3[%c4, %c0_17] : memref<9x128xf32, #tpu.memory_space<vmem>>, vector<1x128xf32>
    %43 = vector.broadcast %42 : vector<1x128xf32> to vector<16x128xf32>
    %44 = arith.mulf %43, %24 : vector<16x128xf32>
    %45 = arith.addf %41, %44 : vector<16x128xf32>
    %c5 = arith.constant 5 : index
    %c0_18 = arith.constant 0 : index
    %46 = vector.load %arg3[%c5, %c0_18] : memref<9x128xf32, #tpu.memory_space<vmem>>, vector<1x128xf32>
    %47 = vector.broadcast %46 : vector<1x128xf32> to vector<16x128xf32>
    %48 = arith.mulf %47, %27 : vector<16x128xf32>
    %49 = arith.addf %45, %48 : vector<16x128xf32>
    %c6 = arith.constant 6 : index
    %c0_19 = arith.constant 0 : index
    %50 = vector.load %arg3[%c6, %c0_19] : memref<9x128xf32, #tpu.memory_space<vmem>>, vector<1x128xf32>
    %51 = vector.broadcast %50 : vector<1x128xf32> to vector<16x128xf32>
    %52 = arith.mulf %51, %21 : vector<16x128xf32>
    %c7 = arith.constant 7 : index
    %c0_20 = arith.constant 0 : index
    %53 = vector.load %arg3[%c7, %c0_20] : memref<9x128xf32, #tpu.memory_space<vmem>>, vector<1x128xf32>
    %54 = vector.broadcast %53 : vector<1x128xf32> to vector<16x128xf32>
    %55 = arith.mulf %54, %24 : vector<16x128xf32>
    %56 = arith.addf %52, %55 : vector<16x128xf32>
    %c8 = arith.constant 8 : index
    %c0_21 = arith.constant 0 : index
    %57 = vector.load %arg3[%c8, %c0_21] : memref<9x128xf32, #tpu.memory_space<vmem>>, vector<1x128xf32>
    %58 = vector.broadcast %57 : vector<1x128xf32> to vector<16x128xf32>
    %59 = arith.mulf %58, %27 : vector<16x128xf32>
    %60 = arith.addf %56, %59 : vector<16x128xf32>
    %61 = vector.extract_strided_slice %49 {offsets = [1, 0], sizes = [15, 128], strides = [1, 1]} : vector<16x128xf32> to vector<15x128xf32>
    %62 = vector.extract_strided_slice %49 {offsets = [0, 0], sizes = [1, 128], strides = [1, 1]} : vector<16x128xf32> to vector<1x128xf32>
    %63 = tpu.concatenate %61, %62 in 0 : vector<15x128xf32>, vector<1x128xf32> -> vector<16x128xf32>
    %64 = arith.addf %38, %63 : vector<16x128xf32>
    %65 = vector.extract_strided_slice %60 {offsets = [2, 0], sizes = [14, 128], strides = [1, 1]} : vector<16x128xf32> to vector<14x128xf32>
    %66 = vector.extract_strided_slice %60 {offsets = [0, 0], sizes = [2, 128], strides = [1, 1]} : vector<16x128xf32> to vector<2x128xf32>
    %67 = tpu.concatenate %65, %66 in 0 : vector<14x128xf32>, vector<2x128xf32> -> vector<16x128xf32>
    %68 = arith.addf %64, %67 : vector<16x128xf32>
    %c0_22 = arith.constant 0 : index
    %c0_23 = arith.constant 0 : index
    %69 = vector.load %arg4[%c0_22, %c0_23] : memref<1x128xf32, #tpu.memory_space<vmem>>, vector<1x128xf32>
    %70 = vector.broadcast %69 : vector<1x128xf32> to vector<16x128xf32>
    %71 = arith.addf %68, %70 : vector<16x128xf32>
    %cst_24 = arith.constant 0.000000e+00 : f32
    %72 = vector.broadcast %cst_24 : f32 to vector<16x128xf32>
    %73 = arith.maximumf %71, %72 : vector<16x128xf32>
    %c0_25 = arith.constant 0 : index
    %c0_26 = arith.constant 0 : index
    %74 = vector.load %arg5[%c0_25, %c0_26] : memref<1x128xf32, #tpu.memory_space<vmem>>, vector<1x128xf32>
    %75 = vector.broadcast %74 : vector<1x128xf32> to vector<16x128xf32>
    %76 = arith.mulf %73, %75 : vector<16x128xf32>
    %77 = vector.extract_strided_slice %76 {offsets = [0, 64], sizes = [16, 64], strides = [1, 1]} : vector<16x128xf32> to vector<16x64xf32>
    %78 = vector.extract_strided_slice %76 {offsets = [0, 0], sizes = [16, 64], strides = [1, 1]} : vector<16x128xf32> to vector<16x64xf32>
    %79 = tpu.concatenate %77, %78 in 1 : vector<16x64xf32>, vector<16x64xf32> -> vector<16x128xf32>
    %80 = arith.addf %76, %79 : vector<16x128xf32>
    %81 = vector.extract_strided_slice %80 {offsets = [0, 96], sizes = [16, 32], strides = [1, 1]} : vector<16x128xf32> to vector<16x32xf32>
    %82 = vector.extract_strided_slice %80 {offsets = [0, 0], sizes = [16, 96], strides = [1, 1]} : vector<16x128xf32> to vector<16x96xf32>
    %83 = tpu.concatenate %81, %82 in 1 : vector<16x32xf32>, vector<16x96xf32> -> vector<16x128xf32>
    %84 = arith.addf %80, %83 : vector<16x128xf32>
    %85 = vector.extract_strided_slice %84 {offsets = [0, 112], sizes = [16, 16], strides = [1, 1]} : vector<16x128xf32> to vector<16x16xf32>
    %86 = vector.extract_strided_slice %84 {offsets = [0, 0], sizes = [16, 112], strides = [1, 1]} : vector<16x128xf32> to vector<16x112xf32>
    %87 = tpu.concatenate %85, %86 in 1 : vector<16x16xf32>, vector<16x112xf32> -> vector<16x128xf32>
    %88 = arith.addf %84, %87 : vector<16x128xf32>
    %c0_27 = arith.constant 0 : index
    %89 = memref.load %arg6[%c0_27] : memref<1xf32, #tpu.memory_space<smem>>
    %90 = vector.broadcast %89 : f32 to vector<16x128xf32>
    %91 = arith.addf %88, %90 : vector<16x128xf32>
    %cst_28 = arith.constant 0.000000e+00 : f32
    %92 = vector.broadcast %cst_28 : f32 to vector<16x128xf32>
    %93 = arith.maximumf %91, %92 : vector<16x128xf32>
    %94 = vector.extract_strided_slice %93 {offsets = [0, 2], sizes = [16, 126], strides = [1, 1]} : vector<16x128xf32> to vector<16x126xf32>
    %95 = vector.extract_strided_slice %93 {offsets = [0, 0], sizes = [16, 2], strides = [1, 1]} : vector<16x128xf32> to vector<16x2xf32>
    %96 = tpu.concatenate %94, %95 in 1 : vector<16x126xf32>, vector<16x2xf32> -> vector<16x128xf32>
    %97 = vector.extract_strided_slice %93 {offsets = [0, 4], sizes = [16, 124], strides = [1, 1]} : vector<16x128xf32> to vector<16x124xf32>
    %98 = vector.extract_strided_slice %93 {offsets = [0, 0], sizes = [16, 4], strides = [1, 1]} : vector<16x128xf32> to vector<16x4xf32>
    %99 = tpu.concatenate %97, %98 in 1 : vector<16x124xf32>, vector<16x4xf32> -> vector<16x128xf32>
    %c0_29 = arith.constant 0 : index
    %100 = memref.load %arg7[%c0_29] : memref<9xf32, #tpu.memory_space<smem>>
    %101 = vector.broadcast %100 : f32 to vector<16x128xf32>
    %102 = arith.mulf %101, %93 : vector<16x128xf32>
    %c1_30 = arith.constant 1 : index
    %103 = memref.load %arg7[%c1_30] : memref<9xf32, #tpu.memory_space<smem>>
    %104 = vector.broadcast %103 : f32 to vector<16x128xf32>
    %105 = arith.mulf %104, %96 : vector<16x128xf32>
    %106 = arith.addf %102, %105 : vector<16x128xf32>
    %c2_31 = arith.constant 2 : index
    %107 = memref.load %arg7[%c2_31] : memref<9xf32, #tpu.memory_space<smem>>
    %108 = vector.broadcast %107 : f32 to vector<16x128xf32>
    %109 = arith.mulf %108, %99 : vector<16x128xf32>
    %110 = arith.addf %106, %109 : vector<16x128xf32>
    %c3_32 = arith.constant 3 : index
    %111 = memref.load %arg7[%c3_32] : memref<9xf32, #tpu.memory_space<smem>>
    %112 = vector.broadcast %111 : f32 to vector<16x128xf32>
    %113 = arith.mulf %112, %93 : vector<16x128xf32>
    %c4_33 = arith.constant 4 : index
    %114 = memref.load %arg7[%c4_33] : memref<9xf32, #tpu.memory_space<smem>>
    %115 = vector.broadcast %114 : f32 to vector<16x128xf32>
    %116 = arith.mulf %115, %96 : vector<16x128xf32>
    %117 = arith.addf %113, %116 : vector<16x128xf32>
    %c5_34 = arith.constant 5 : index
    %118 = memref.load %arg7[%c5_34] : memref<9xf32, #tpu.memory_space<smem>>
    %119 = vector.broadcast %118 : f32 to vector<16x128xf32>
    %120 = arith.mulf %119, %99 : vector<16x128xf32>
    %121 = arith.addf %117, %120 : vector<16x128xf32>
    %c6_35 = arith.constant 6 : index
    %122 = memref.load %arg7[%c6_35] : memref<9xf32, #tpu.memory_space<smem>>
    %123 = vector.broadcast %122 : f32 to vector<16x128xf32>
    %124 = arith.mulf %123, %93 : vector<16x128xf32>
    %c7_36 = arith.constant 7 : index
    %125 = memref.load %arg7[%c7_36] : memref<9xf32, #tpu.memory_space<smem>>
    %126 = vector.broadcast %125 : f32 to vector<16x128xf32>
    %127 = arith.mulf %126, %96 : vector<16x128xf32>
    %128 = arith.addf %124, %127 : vector<16x128xf32>
    %c8_37 = arith.constant 8 : index
    %129 = memref.load %arg7[%c8_37] : memref<9xf32, #tpu.memory_space<smem>>
    %130 = vector.broadcast %129 : f32 to vector<16x128xf32>
    %131 = arith.mulf %130, %99 : vector<16x128xf32>
    %132 = arith.addf %128, %131 : vector<16x128xf32>
    %133 = vector.extract_strided_slice %121 {offsets = [2, 0], sizes = [14, 128], strides = [1, 1]} : vector<16x128xf32> to vector<14x128xf32>
    %134 = vector.extract_strided_slice %121 {offsets = [0, 0], sizes = [2, 128], strides = [1, 1]} : vector<16x128xf32> to vector<2x128xf32>
    %135 = tpu.concatenate %133, %134 in 0 : vector<14x128xf32>, vector<2x128xf32> -> vector<16x128xf32>
    %136 = arith.addf %110, %135 : vector<16x128xf32>
    %137 = vector.extract_strided_slice %132 {offsets = [4, 0], sizes = [12, 128], strides = [1, 1]} : vector<16x128xf32> to vector<12x128xf32>
    %138 = vector.extract_strided_slice %132 {offsets = [0, 0], sizes = [4, 128], strides = [1, 1]} : vector<16x128xf32> to vector<4x128xf32>
    %139 = tpu.concatenate %137, %138 in 0 : vector<12x128xf32>, vector<4x128xf32> -> vector<16x128xf32>
    %140 = arith.addf %136, %139 : vector<16x128xf32>
    %c0_38 = arith.constant 0 : index
    %141 = memref.load %arg8[%c0_38] : memref<1xf32, #tpu.memory_space<smem>>
    %142 = vector.broadcast %141 : f32 to vector<16x128xf32>
    %143 = arith.addf %140, %142 : vector<16x128xf32>
    %c0_39 = arith.constant 0 : index
    %c0_40 = arith.constant 0 : index
    %144 = vector.load %arg9[%c0_39, %c0_40] : memref<16x128xf32, #tpu.memory_space<vmem>>, vector<16x128xf32>
    tpu.vector_store %arg9[%c0_39, %c0_40], %143 {strides = array<i32>} : memref<16x128xf32, #tpu.memory_space<vmem>>, vector<16x128xf32>,
    return
  }
}

</mosaic_0001>

<llo_original>
// kernel: tile.7
$region0: #{tile.7}
  %s0 = inlined_call_operand.vmem [shape: f32[3,16,8,16], index: 0, kind: input, shape index: {}]
  %s1 = inlined_call_operand.vmem [shape: f32[3,16,128], index: 1, kind: output, shape index: {}]
  %v2 = vld [vmem:[%s0] ss:$8 sm:$0xf]
  %v3 = vld [vmem:[%s0] ss:$8 sm:$0xf0]
  %vm4 = vcmask 1047556
  %v5 = vsel %vm4, %v3, %v2
  %vm6 = vcmask 130048
  %7 = vst.msk [vmem:[%s1] sm:$0xff] %vm6, %v5
  %s8 = scalar_lea.vmem %s0, 64
  %v9 = vld [vmem:[%s8] ss:$8 sm:$0xf]
  %s10 = scalar_lea.vmem %s0, 64
  %v11 = vld [vmem:[%s10] ss:$8 sm:$0xf0]
  %vm12 = vcmask 1047556
  %v13 = vsel %vm12, %v11, %v9
  %vm14 = vcmask 130048
  %s15 = scalar_lea.vmem %s1, 8
  %16 = vst.msk [vmem:[%s15] sm:$0xff] %vm14, %v13
  %s17 = scalar_lea.vmem %s0, 128
  %v18 = vld [vmem:[%s17] ss:$8 sm:$0xf]
  %s19 = scalar_lea.vmem %s0, 128
  %v20 = vld [vmem:[%s19] ss:$8 sm:$0xf0]
  %vm21 = vcmask 1047556
  %v22 = vsel %vm21, %v20, %v18
  %vm23 = vcmask 130048
  %s24 = scalar_lea.vmem %s1, 16
  %25 = vst.msk [vmem:[%s24] sm:$0xff] %vm23, %v22
  %s26 = scalar_lea.vmem %s0, 192
  %v27 = vld [vmem:[%s26] ss:$8 sm:$0xf]
  %s28 = scalar_lea.vmem %s0, 192
  %v29 = vld [vmem:[%s28] ss:$8 sm:$0xf0]
  %vm30 = vcmask 1047556
  %v31 = vsel %vm30, %v29, %v27
  %vm32 = vcmask 130048
  %s33 = scalar_lea.vmem %s1, 24
  %34 = vst.msk [vmem:[%s33] sm:$0xff] %vm32, %v31
  %s35 = scalar_lea.vmem %s0, 256
  %v36 = vld [vmem:[%s35] ss:$8 sm:$0xf]
  %s37 = scalar_lea.vmem %s0, 256
  %v38 = vld [vmem:[%s37] ss:$8 sm:$0xf0]
  %vm39 = vcmask 1047556
  %v40 = vsel %vm39, %v38, %v36
  %vm41 = vcmask 130048
  %s42 = scalar_lea.vmem %s1, 32
  %43 = vst.msk [vmem:[%s42] sm:$0xff] %vm41, %v40
  %s44 = scalar_lea.vmem %s0, 320
  %v45 = vld [vmem:[%s44] ss:$8 sm:$0xf]
  %s46 = scalar_lea.vmem %s0, 320
  %v47 = vld [vmem:[%s46] ss:$8 sm:$0xf0]
  %vm48 = vcmask 1047556
  %v49 = vsel %vm48, %v47, %v45
  %vm50 = vcmask 130048
  %s51 = scalar_lea.vmem %s1, 40
  %52 = vst.msk [vmem:[%s51] sm:$0xff] %vm50, %v49
  %s53 = scalar_lea.vmem %s0, 7
  %v54 = vld [vmem:[%s53] ss:$8 sm:$0xf]
  %s55 = scalar_lea.vmem %s0, 7
  %v56 = vld [vmem:[%s55] ss:$8 sm:$0xf0]
  %vm57 = vcmask 1047556
  %v58 = vsel %vm57, %v56, %v54
  %59 = vrot.lane.b32.xlu0 %v58, 112
  %v60 = vpop.permute.xlu0 %59
  %vm61 = vcmask 1048448
  %62 = vst.msk [vmem:[%s1] sm:$0xff] %vm61, %v60
  %s63 = scalar_lea.vmem %s0, 263
  %v64 = vld [vmem:[%s63] ss:$8 sm:$0xf]
  %s65 = scalar_lea.vmem %s0, 263
  %v66 = vld [vmem:[%s65] ss:$8 sm:$0xf0]
  %vm67 = vcmask 1047556
  %v68 = vsel %vm67, %v66, %v64
  %69 = vrot.lane.b32.xlu0 %v68, 112
  %v70 = vpop.permute.xlu0 %69
  %vm71 = vcmask 1048448
  %s72 = scalar_lea.vmem %s1, 32
  %73 = vst.msk [vmem:[%s72] sm:$0xff] %vm71, %v70
  %s74 = scalar_lea.vmem %s0, 71
  %v75 = vld [vmem:[%s74] ss:$8 sm:$0xf]
  %s76 = scalar_lea.vmem %s0, 71
  %v77 = vld [vmem:[%s76] ss:$8 sm:$0xf0]
  %vm78 = vcmask 1047556
  %v79 = vsel %vm78, %v77, %v75
  %80 = vrot.lane.b32.xlu0 %v79, 112
  %v81 = vpop.permute.xlu0 %80
  %vm82 = vcmask 1048448
  %s83 = scalar_lea.vmem %s1, 8
  %84 = vst.msk [vmem:[%s83] sm:$0xff] %vm82, %v81
  %s85 = scalar_lea.vmem %s0, 327
  %v86 = vld [vmem:[%s85] ss:$8 sm:$0xf]
  %s87 = scalar_lea.vmem %s0, 327
  %v88 = vld [vmem:[%s87] ss:$8 sm:$0xf0]
  %vm89 = vcmask 1047556
  %v90 = vsel %vm89, %v88, %v86
  %91 = vrot.lane.b32.xlu0 %v90, 112
  %v92 = vpop.permute.xlu0 %91
  %vm93 = vcmask 1048448
  %s94 = scalar_lea.vmem %s1, 40
  %95 = vst.msk [vmem:[%s94] sm:$0xff] %vm93, %v92
  %s96 = scalar_lea.vmem %s0, 135
  %v97 = vld [vmem:[%s96] ss:$8 sm:$0xf]
  %s98 = scalar_lea.vmem %s0, 135
  %v99 = vld [vmem:[%s98] ss:$8 sm:$0xf0]
  %vm100 = vcmask 1047556
  %v101 = vsel %vm100, %v99, %v97
  %102 = vrot.lane.b32.xlu0 %v101, 112
  %v103 = vpop.permute.xlu0 %102
  %vm104 = vcmask 1048448
  %s105 = scalar_lea.vmem %s1, 16
  %106 = vst.msk [vmem:[%s105] sm:$0xff] %vm104, %v103
  %s107 = scalar_lea.vmem %s0, 199
  %v108 = vld [vmem:[%s107] ss:$8 sm:$0xf]
  %s109 = scalar_lea.vmem %s0, 199
  %v110 = vld [vmem:[%s109] ss:$8 sm:$0xf0]
  %vm111 = vcmask 1047556
  %v112 = vsel %vm111, %v110, %v108
  %113 = vrot.lane.b32.xlu0 %v112, 112
  %v114 = vpop.permute.xlu0 %113
  %vm115 = vcmask 1048448
  %s116 = scalar_lea.vmem %s1, 24
  %117 = vst.msk [vmem:[%s116] sm:$0xff] %vm115, %v114
  %s118 = scalar_lea.vmem %s0, 6
  %v119 = vld [vmem:[%s118] ss:$8 sm:$0xf]
  %s120 = scalar_lea.vmem %s0, 6
  %v121 = vld [vmem:[%s120] ss:$8 sm:$0xf0]
  %vm122 = vcmask 1047556
  %v123 = vsel %vm122, %v121, %v119
  %124 = vrot.lane.b32.xlu0 %v123, 96
  %v125 = vpop.permute.xlu0 %124
  %vm126 = vcmask 917248
  %127 = vst.msk [vmem:[%s1] sm:$0xff] %vm126, %v125
  %s128 = scalar_lea.vmem %s0, 262
  %v129 = vld [vmem:[%s128] ss:$8 sm:$0xf]
  %s130 = scalar_lea.vmem %s0, 262
  %v131 = vld [vmem:[%s130] ss:$8 sm:$0xf0]
  %vm132 = vcmask 1047556
  %v133 = vsel %vm132, %v131, %v129
  %134 = vrot.lane.b32.xlu0 %v133, 96
  %v135 = vpop.permute.xlu0 %134
  %vm136 = vcmask 917248
  %s137 = scalar_lea.vmem %s1, 32
  %138 = vst.msk [vmem:[%s137] sm:$0xff] %vm136, %v135
  %s139 = scalar_lea.vmem %s0, 70
  %v140 = vld [vmem:[%s139] ss:$8 sm:$0xf]
  %s141 = scalar_lea.vmem %s0, 70
  %v142 = vld [vmem:[%s141] ss:$8 sm:$0xf0]
  %vm143 = vcmask 1047556
  %v144 = vsel %vm143, %v142, %v140
  %145 = vrot.lane.b32.xlu0 %v144, 96
  %v146 = vpop.permute.xlu0 %145
  %vm147 = vcmask 917248
  %s148 = scalar_lea.vmem %s1, 8
  %149 = vst.msk [vmem:[%s148] sm:$0xff] %vm147, %v146
  %s150 = scalar_lea.vmem %s0, 326
  %v151 = vld [vmem:[%s150] ss:$8 sm:$0xf]
  %s152 = scalar_lea.vmem %s0, 326
  %v153 = vld [vmem:[%s152] ss:$8 sm:$0xf0]
  %vm154 = vcmask 1047556
  %v155 = vsel %vm154, %v153, %v151
  %156 = vrot.lane.b32.xlu0 %v155, 96
  %v157 = vpop.permute.xlu0 %156
  %vm158 = vcmask 917248
  %s159 = scalar_lea.vmem %s1, 40
  %160 = vst.msk [vmem:[%s159] sm:$0xff] %vm158, %v157
  %s161 = scalar_lea.vmem %s0, 134
  %v162 = vld [vmem:[%s161] ss:$8 sm:$0xf]
  %s163 = scalar_lea.vmem %s0, 134
  %v164 = vld [vmem:[%s163] ss:$8 sm:$0xf0]
  %vm165 = vcmask 1047556
  %v166 = vsel %vm165, %v164, %v162
  %167 = vrot.lane.b32.xlu0 %v166, 96
  %v168 = vpop.permute.xlu0 %167
  %vm169 = vcmask 917248
  %s170 = scalar_lea.vmem %s1, 16
  %171 = vst.msk [vmem:[%s170] sm:$0xff] %vm169, %v168
  %s172 = scalar_lea.vmem %s0, 198
  %v173 = vld [vmem:[%s172] ss:$8 sm:$0xf]
  %s174 = scalar_lea.vmem %s0, 198
  %v175 = vld [vmem:[%s174] ss:$8 sm:$0xf0]
  %vm176 = vcmask 1047556
  %v177 = vsel %vm176, %v175, %v173
  %178 = vrot.lane.b32.xlu0 %v177, 96
  %v179 = vpop.permute.xlu0 %178
  %vm180 = vcmask 917248
  %s181 = scalar_lea.vmem %s1, 24
  %182 = vst.msk [vmem:[%s181] sm:$0xff] %vm180, %v179
  %s183 = scalar_lea.vmem %s0, 5
  %v184 = vld [vmem:[%s183] ss:$8 sm:$0xf]
  %s185 = scalar_lea.vmem %s0, 5
  %v186 = vld [vmem:[%s185] ss:$8 sm:$0xf0]
  %vm187 = vcmask 1047556
  %v188 = vsel %vm187, %v186, %v184
  %189 = vrot.lane.b32.xlu0 %v188, 80
  %v190 = vpop.permute.xlu0 %189
  %vm191 = vcmask 786048
  %192 = vst.msk [vmem:[%s1] sm:$0xff] %vm191, %v190
  %s193 = scalar_lea.vmem %s0, 261
  %v194 = vld [vmem:[%s193] ss:$8 sm:$0xf]
  %s195 = scalar_lea.vmem %s0, 261
  %v196 = vld [vmem:[%s195] ss:$8 sm:$0xf0]
  %vm197 = vcmask 1047556
  %v198 = vsel %vm197, %v196, %v194
  %199 = vrot.lane.b32.xlu0 %v198, 80
  %v200 = vpop.permute.xlu0 %199
  %vm201 = vcmask 786048
  %s202 = scalar_lea.vmem %s1, 32
  %203 = vst.msk [vmem:[%s202] sm:$0xff] %vm201, %v200
  %s204 = scalar_lea.vmem %s0, 69
  %v205 = vld [vmem:[%s204] ss:$8 sm:$0xf]
  %s206 = scalar_lea.vmem %s0, 69
  %v207 = vld [vmem:[%s206] ss:$8 sm:$0xf0]
  %vm208 = vcmask 1047556
  %v209 = vsel %vm208, %v207, %v205
  %210 = vrot.lane.b32.xlu0 %v209, 80
  %v211 = vpop.permute.xlu0 %210
  %vm212 = vcmask 786048
  %s213 = scalar_lea.vmem %s1, 8
  %214 = vst.msk [vmem:[%s213] sm:$0xff] %vm212, %v211
  %s215 = scalar_lea.vmem %s0, 325
  %v216 = vld [vmem:[%s215] ss:$8 sm:$0xf]
  %s217 = scalar_lea.vmem %s0, 325
  %v218 = vld [vmem:[%s217] ss:$8 sm:$0xf0]
  %vm219 = vcmask 1047556
  %v220 = vsel %vm219, %v218, %v216
  %221 = vrot.lane.b32.xlu0 %v220, 80
  %v222 = vpop.permute.xlu0 %221
  %vm223 = vcmask 786048
  %s224 = scalar_lea.vmem %s1, 40
  %225 = vst.msk [vmem:[%s224] sm:$0xff] %vm223, %v222
  %s226 = scalar_lea.vmem %s0, 133
  %v227 = vld [vmem:[%s226] ss:$8 sm:$0xf]
  %s228 = scalar_lea.vmem %s0, 133
  %v229 = vld [vmem:[%s228] ss:$8 sm:$0xf0]
  %vm230 = vcmask 1047556
  %v231 = vsel %vm230, %v229, %v227
  %232 = vrot.lane.b32.xlu0 %v231, 80
  %v233 = vpop.permute.xlu0 %232
  %vm234 = vcmask 786048
  %s235 = scalar_lea.vmem %s1, 16
  %236 = vst.msk [vmem:[%s235] sm:$0xff] %vm234, %v233
  %s237 = scalar_lea.vmem %s0, 197
  %v238 = vld [vmem:[%s237] ss:$8 sm:$0xf]
  %s239 = scalar_lea.vmem %s0, 197
  %v240 = vld [vmem:[%s239] ss:$8 sm:$0xf0]
  %vm241 = vcmask 1047556
  %v242 = vsel %vm241, %v240, %v238
  %243 = vrot.lane.b32.xlu0 %v242, 80
  %v244 = vpop.permute.xlu0 %243
  %vm245 = vcmask 786048
  %s246 = scalar_lea.vmem %s1, 24
  %247 = vst.msk [vmem:[%s246] sm:$0xff] %vm245, %v244
  %s248 = scalar_lea.vmem %s0, 4
  %v249 = vld [vmem:[%s248] ss:$8 sm:$0xf]
  %s250 = scalar_lea.vmem %s0, 4
  %v251 = vld [vmem:[%s250] ss:$8 sm:$0xf0]
  %vm252 = vcmask 1047556
  %v253 = vsel %vm252, %v251, %v249
  %254 = vrot.lane.b32.xlu0 %v253, 64
  %v255 = vpop.permute.xlu0 %254
  %vm256 = vcmask 654848
  %257 = vst.msk [vmem:[%s1] sm:$0xff] %vm256, %v255
  %s258 = scalar_lea.vmem %s0, 260
  %v259 = vld [vmem:[%s258] ss:$8 sm:$0xf]
  %s260 = scalar_lea.vmem %s0, 260
  %v261 = vld [vmem:[%s260] ss:$8 sm:$0xf0]
  %vm262 = vcmask 1047556
  %v263 = vsel %vm262, %v261, %v259
  %264 = vrot.lane.b32.xlu0 %v263, 64
  %v265 = vpop.permute.xlu0 %264
  %vm266 = vcmask 654848
  %s267 = scalar_lea.vmem %s1, 32
  %268 = vst.msk [vmem:[%s267] sm:$0xff] %vm266, %v265
  %s269 = scalar_lea.vmem %s0, 68
  %v270 = vld [vmem:[%s269] ss:$8 sm:$0xf]
  %s271 = scalar_lea.vmem %s0, 68
  %v272 = vld [vmem:[%s271] ss:$8 sm:$0xf0]
  %vm273 = vcmask 1047556
  %v274 = vsel %vm273, %v272, %v270
  %275 = vrot.lane.b32.xlu0 %v274, 64
  %v276 = vpop.permute.xlu0 %275
  %vm277 = vcmask 654848
  %s278 = scalar_lea.vmem %s1, 8
  %279 = vst.msk [vmem:[%s278] sm:$0xff] %vm277, %v276
  %s280 = scalar_lea.vmem %s0, 324
  %v281 = vld [vmem:[%s280] ss:$8 sm:$0xf]
  %s282 = scalar_lea.vmem %s0, 324
  %v283 = vld [vmem:[%s282] ss:$8 sm:$0xf0]
  %vm284 = vcmask 1047556
  %v285 = vsel %vm284, %v283, %v281
  %286 = vrot.lane.b32.xlu0 %v285, 64
  %v287 = vpop.permute.xlu0 %286
  %vm288 = vcmask 654848
  %s289 = scalar_lea.vmem %s1, 40
  %290 = vst.msk [vmem:[%s289] sm:$0xff] %vm288, %v287
  %s291 = scalar_lea.vmem %s0, 132
  %v292 = vld [vmem:[%s291] ss:$8 sm:$0xf]
  %s293 = scalar_lea.vmem %s0, 132
  %v294 = vld [vmem:[%s293] ss:$8 sm:$0xf0]
  %vm295 = vcmask 1047556
  %v296 = vsel %vm295, %v294, %v292
  %297 = vrot.lane.b32.xlu0 %v296, 64
  %v298 = vpop.permute.xlu0 %297
  %vm299 = vcmask 654848
  %s300 = scalar_lea.vmem %s1, 16
  %301 = vst.msk [vmem:[%s300] sm:$0xff] %vm299, %v298
  %s302 = scalar_lea.vmem %s0, 196
  %v303 = vld [vmem:[%s302] ss:$8 sm:$0xf]
  %s304 = scalar_lea.vmem %s0, 196
  %v305 = vld [vmem:[%s304] ss:$8 sm:$0xf0]
  %vm306 = vcmask 1047556
  %v307 = vsel %vm306, %v305, %v303
  %308 = vrot.lane.b32.xlu0 %v307, 64
  %v309 = vpop.permute.xlu0 %308
  %vm310 = vcmask 654848
  %s311 = scalar_lea.vmem %s1, 24
  %312 = vst.msk [vmem:[%s311] sm:$0xff] %vm310, %v309
  %s313 = scalar_lea.vmem %s0, 3
  %v314 = vld [vmem:[%s313] ss:$8 sm:$0xf]
  %s315 = scalar_lea.vmem %s0, 3
  %v316 = vld [vmem:[%s315] ss:$8 sm:$0xf0]
  %vm317 = vcmask 1047556
  %v318 = vsel %vm317, %v316, %v314
  %319 = vrot.lane.b32.xlu0 %v318, 48
  %v320 = vpop.permute.xlu0 %319
  %vm321 = vcmask 523648
  %322 = vst.msk [vmem:[%s1] sm:$0xff] %vm321, %v320
  %s323 = scalar_lea.vmem %s0, 259
  %v324 = vld [vmem:[%s323] ss:$8 sm:$0xf]
  %s325 = scalar_lea.vmem %s0, 259
  %v326 = vld [vmem:[%s325] ss:$8 sm:$0xf0]
  %vm327 = vcmask 1047556
  %v328 = vsel %vm327, %v326, %v324
  %329 = vrot.lane.b32.xlu0 %v328, 48
  %v330 = vpop.permute.xlu0 %329
  %vm331 = vcmask 523648
  %s332 = scalar_lea.vmem %s1, 32
  %333 = vst.msk [vmem:[%s332] sm:$0xff] %vm331, %v330
  %s334 = scalar_lea.vmem %s0, 67
  %v335 = vld [vmem:[%s334] ss:$8 sm:$0xf]
  %s336 = scalar_lea.vmem %s0, 67
  %v337 = vld [vmem:[%s336] ss:$8 sm:$0xf0]
  %vm338 = vcmask 1047556
  %v339 = vsel %vm338, %v337, %v335
  %340 = vrot.lane.b32.xlu0 %v339, 48
  %v341 = vpop.permute.xlu0 %340
  %vm342 = vcmask 523648
  %s343 = scalar_lea.vmem %s1, 8
  %344 = vst.msk [vmem:[%s343] sm:$0xff] %vm342, %v341
  %s345 = scalar_lea.vmem %s0, 323
  %v346 = vld [vmem:[%s345] ss:$8 sm:$0xf]
  %s347 = scalar_lea.vmem %s0, 323
  %v348 = vld [vmem:[%s347] ss:$8 sm:$0xf0]
  %vm349 = vcmask 1047556
  %v350 = vsel %vm349, %v348, %v346
  %351 = vrot.lane.b32.xlu0 %v350, 48
  %v352 = vpop.permute.xlu0 %351
  %vm353 = vcmask 523648
  %s354 = scalar_lea.vmem %s1, 40
  %355 = vst.msk [vmem:[%s354] sm:$0xff] %vm353, %v352
  %s356 = scalar_lea.vmem %s0, 131
  %v357 = vld [vmem:[%s356] ss:$8 sm:$0xf]
  %s358 = scalar_lea.vmem %s0, 131
  %v359 = vld [vmem:[%s358] ss:$8 sm:$0xf0]
  %vm360 = vcmask 1047556
  %v361 = vsel %vm360, %v359, %v357
  %362 = vrot.lane.b32.xlu0 %v361, 48
  %v363 = vpop.permute.xlu0 %362
  %vm364 = vcmask 523648
  %s365 = scalar_lea.vmem %s1, 16
  %366 = vst.msk [vmem:[%s365] sm:$0xff] %vm364, %v363
  %s367 = scalar_lea.vmem %s0, 195
  %v368 = vld [vmem:[%s367] ss:$8 sm:$0xf]
  %s369 = scalar_lea.vmem %s0, 195
  %v370 = vld [vmem:[%s369] ss:$8 sm:$0xf0]
  %vm371 = vcmask 1047556
  %v372 = vsel %vm371, %v370, %v368
  %373 = vrot.lane.b32.xlu0 %v372, 48
  %v374 = vpop.permute.xlu0 %373
  %vm375 = vcmask 523648
  %s376 = scalar_lea.vmem %s1, 24
  %377 = vst.msk [vmem:[%s376] sm:$0xff] %vm375, %v374
  %s378 = scalar_lea.vmem %s0, 2
  %v379 = vld [vmem:[%s378] ss:$8 sm:$0xf]
  %s380 = scalar_lea.vmem %s0, 2
  %v381 = vld [vmem:[%s380] ss:$8 sm:$0xf0]
  %vm382 = vcmask 1047556
  %v383 = vsel %vm382, %v381, %v379
  %384 = vrot.lane.b32.xlu0 %v383, 32
  %v385 = vpop.permute.xlu0 %384
  %vm386 = vcmask 392448
  %387 = vst.msk [vmem:[%s1] sm:$0xff] %vm386, %v385
  %s388 = scalar_lea.vmem %s0, 258
  %v389 = vld [vmem:[%s388] ss:$8 sm:$0xf]
  %s390 = scalar_lea.vmem %s0, 258
  %v391 = vld [vmem:[%s390] ss:$8 sm:$0xf0]
  %vm392 = vcmask 1047556
  %v393 = vsel %vm392, %v391, %v389
  %394 = vrot.lane.b32.xlu0 %v393, 32
  %v395 = vpop.permute.xlu0 %394
  %vm396 = vcmask 392448
  %s397 = scalar_lea.vmem %s1, 32
  %398 = vst.msk [vmem:[%s397] sm:$0xff] %vm396, %v395
  %s399 = scalar_lea.vmem %s0, 66
  %v400 = vld [vmem:[%s399] ss:$8 sm:$0xf]
  %s401 = scalar_lea.vmem %s0, 66
  %v402 = vld [vmem:[%s401] ss:$8 sm:$0xf0]
  %vm403 = vcmask 1047556
  %v404 = vsel %vm403, %v402, %v400
  %405 = vrot.lane.b32.xlu0 %v404, 32
  %v406 = vpop.permute.xlu0 %405
  %vm407 = vcmask 392448
  %s408 = scalar_lea.vmem %s1, 8
  %409 = vst.msk [vmem:[%s408] sm:$0xff] %vm407, %v406
  %s410 = scalar_lea.vmem %s0, 322
  %v411 = vld [vmem:[%s410] ss:$8 sm:$0xf]
  %s412 = scalar_lea.vmem %s0, 322
  %v413 = vld [vmem:[%s412] ss:$8 sm:$0xf0]
  %vm414 = vcmask 1047556
  %v415 = vsel %vm414, %v413, %v411
  %416 = vrot.lane.b32.xlu0 %v415, 32
  %v417 = vpop.permute.xlu0 %416
  %vm418 = vcmask 392448
  %s419 = scalar_lea.vmem %s1, 40
  %420 = vst.msk [vmem:[%s419] sm:$0xff] %vm418, %v417
  %s421 = scalar_lea.vmem %s0, 130
  %v422 = vld [vmem:[%s421] ss:$8 sm:$0xf]
  %s423 = scalar_lea.vmem %s0, 130
  %v424 = vld [vmem:[%s423] ss:$8 sm:$0xf0]
  %vm425 = vcmask 1047556
  %v426 = vsel %vm425, %v424, %v422
  %427 = vrot.lane.b32.xlu0 %v426, 32
  %v428 = vpop.permute.xlu0 %427
  %vm429 = vcmask 392448
  %s430 = scalar_lea.vmem %s1, 16
  %431 = vst.msk [vmem:[%s430] sm:$0xff] %vm429, %v428
  %s432 = scalar_lea.vmem %s0, 194
  %v433 = vld [vmem:[%s432] ss:$8 sm:$0xf]
  %s434 = scalar_lea.vmem %s0, 194
  %v435 = vld [vmem:[%s434] ss:$8 sm:$0xf0]
  %vm436 = vcmask 1047556
  %v437 = vsel %vm436, %v435, %v433
  %438 = vrot.lane.b32.xlu0 %v437, 32
  %v439 = vpop.permute.xlu0 %438
  %vm440 = vcmask 392448
  %s441 = scalar_lea.vmem %s1, 24
  %442 = vst.msk [vmem:[%s441] sm:$0xff] %vm440, %v439
  %s443 = scalar_lea.vmem %s0, 1
  %v444 = vld [vmem:[%s443] ss:$8 sm:$0xf]
  %s445 = scalar_lea.vmem %s0, 1
  %v446 = vld [vmem:[%s445] ss:$8 sm:$0xf0]
  %vm447 = vcmask 1047556
  %v448 = vsel %vm447, %v446, %v444
  %449 = vrot.lane.b32.xlu0 %v448, 16
  %v450 = vpop.permute.xlu0 %449
  %vm451 = vcmask 261248
  %452 = vst.msk [vmem:[%s1] sm:$0xff] %vm451, %v450
  %s453 = scalar_lea.vmem %s0, 257
  %v454 = vld [vmem:[%s453] ss:$8 sm:$0xf]
  %s455 = scalar_lea.vmem %s0, 257
  %v456 = vld [vmem:[%s455] ss:$8 sm:$0xf0]
  %vm457 = vcmask 1047556
  %v458 = vsel %vm457, %v456, %v454
  %459 = vrot.lane.b32.xlu0 %v458, 16
  %v460 = vpop.permute.xlu0 %459
  %vm461 = vcmask 261248
  %s462 = scalar_lea.vmem %s1, 32
  %463 = vst.msk [vmem:[%s462] sm:$0xff] %vm461, %v460
  %s464 = scalar_lea.vmem %s0, 65
  %v465 = vld [vmem:[%s464] ss:$8 sm:$0xf]
  %s466 = scalar_lea.vmem %s0, 65
  %v467 = vld [vmem:[%s466] ss:$8 sm:$0xf0]
  %vm468 = vcmask 1047556
  %v469 = vsel %vm468, %v467, %v465
  %470 = vrot.lane.b32.xlu0 %v469, 16
  %v471 = vpop.permute.xlu0 %470
  %vm472 = vcmask 261248
  %s473 = scalar_lea.vmem %s1, 8
  %474 = vst.msk [vmem:[%s473] sm:$0xff] %vm472, %v471
  %s475 = scalar_lea.vmem %s0, 321
  %v476 = vld [vmem:[%s475] ss:$8 sm:$0xf]
  %s477 = scalar_lea.vmem %s0, 321
  %v478 = vld [vmem:[%s477] ss:$8 sm:$0xf0]
  %vm479 = vcmask 1047556
  %v480 = vsel %vm479, %v478, %v476
  %481 = vrot.lane.b32.xlu0 %v480, 16
  %v482 = vpop.permute.xlu0 %481
  %vm483 = vcmask 261248
  %s484 = scalar_lea.vmem %s1, 40
  %485 = vst.msk [vmem:[%s484] sm:$0xff] %vm483, %v482
  %s486 = scalar_lea.vmem %s0, 129
  %v487 = vld [vmem:[%s486] ss:$8 sm:$0xf]
  %s488 = scalar_lea.vmem %s0, 129
  %v489 = vld [vmem:[%s488] ss:$8 sm:$0xf0]
  %vm490 = vcmask 1047556
  %v491 = vsel %vm490, %v489, %v487
  %492 = vrot.lane.b32.xlu0 %v491, 16
  %v493 = vpop.permute.xlu0 %492
  %vm494 = vcmask 261248
  %s495 = scalar_lea.vmem %s1, 16
  %496 = vst.msk [vmem:[%s495] sm:$0xff] %vm494, %v493
  %s497 = scalar_lea.vmem %s0, 193
  %v498 = vld [vmem:[%s497] ss:$8 sm:$0xf]
  %s499 = scalar_lea.vmem %s0, 193
  %v500 = vld [vmem:[%s499] ss:$8 sm:$0xf0]
  %vm501 = vcmask 1047556
  %v502 = vsel %vm501, %v500, %v498
  %503 = vrot.lane.b32.xlu0 %v502, 16
  %v504 = vpop.permute.xlu0 %503
  %vm505 = vcmask 261248
  %s506 = scalar_lea.vmem %s1, 24
  %507 = vst.msk [vmem:[%s506] sm:$0xff] %vm505, %v504

// kernel: qrnet_forward.1
$region0: #{qrnet_forward.1}
  #allocation0 [shape = 'u32[]', space=smem, size = 0x4, offset = 0x4, fixed_abs, tag = 'smem constant byte address 0x4 - core index']
  #allocation1 [shape = 'u32[72,128]{1,0:T(1,128)}', space=vmem, size = 0x9000, scoped, tag = 'internal scratch']
  #allocation2 [shape = 'f32[1]{0:T(128)S(6)}', space=smem, size = 0x200, scoped, tag = 'scoped memory for qrnet_forward.1']
  #allocation3 [shape = 'f32[1]{0:T(128)S(6)}', space=smem, size = 0x200, scoped, tag = 'scoped memory for qrnet_forward.1']
  #allocation4 [shape = 'f32[1]{0:T(128)S(6)}', space=smem, size = 0x200, scoped, tag = 'scoped memory for qrnet_forward.1']
  %s0 = inlined_call_operand.vmem [shape: f32[3,16,128], index: 0, kind: input, shape index: {}]
  %s1 = inlined_call_operand.vmem [shape: f32[3], index: 1, kind: input, shape index: {}]
  %s2 = inlined_call_operand.<no memory space> [shape: f32[1], index: 2, kind: input, shape index: {}]
  %s3 = inlined_call_operand.vmem [shape: f32[9,128], index: 3, kind: input, shape index: {}]
  %s4 = inlined_call_operand.vmem [shape: f32[1,128], index: 4, kind: input, shape index: {}]
  %s5 = inlined_call_operand.vmem [shape: f32[1,128], index: 5, kind: input, shape index: {}]
  %s6 = inlined_call_operand.<no memory space> [shape: f32[1], index: 6, kind: input, shape index: {}]
  %s7 = inlined_call_operand.vmem [shape: f32[9], index: 7, kind: input, shape index: {}]
  %s8 = inlined_call_operand.<no memory space> [shape: f32[1], index: 8, kind: input, shape index: {}]
  %s9 = inlined_call_operand.vmem [shape: f32[16,128], index: 9, kind: output, shape index: {}]
  %s10 = sld [smem:[#allocation0]]
  $region54: #{qrnet_forward.1} parent=0
    _
  %s12 = ssub.s32 1, %s10
  %s13 = scalar_select 0, %s12, %s10
  %14 = sst [smem:[#allocation2]] %s2
  %15 = sst [smem:[#allocation3]] %s6
  %16 = sst [smem:[#allocation4]] %s8
  $region1: #{qrnet_forward.1} parent=0
    #allocation5 [shape = 'u8[512]{0}', space=smem, size = 0x200, scoped, tag = 'input window, operand 1, single buffered']
    #allocation6 [shape = 's32[1]{0}', space=sflag, size = 0x4, scoped, tag = 'scoped memory for qrnet_forward.1']
    #allocation7 [shape = 'u8[512]{0}', space=smem, size = 0x200, scoped, tag = 'input window, operand 7, single buffered']
    #allocation8 [shape = 's32[1]{0}', space=sflag, size = 0x4, scoped, tag = 'scoped memory for qrnet_forward.1']
    %17 = vsyncpa [#allocation6], 0
    %18 = vsyncpa [#allocation8], 0
    // Predicated region
    $region2: #{qrnet_forward.1} parent=1 // pred_check
      _
    $region3: #{qrnet_forward.1} parent=1 // pred_check_branch
      %20 = sbr.rel (0) target = $region5
    $region4: #{qrnet_forward.1} parent=1 // pred_region
      _
    $region5: #{qrnet_forward.1} parent=1 // pred_fallthru
      _
    // Predicated region
    $region6: #{qrnet_forward.1} parent=1 // pred_check
      _
    $region7: #{qrnet_forward.1} parent=1 // pred_check_branch
      %22 = sbr.rel (0) target = $region9
    $region8: #{qrnet_forward.1} parent=1 // pred_region
      %24 = vsyncadd [#allocation6], 0
      %s26 = sshll.u32 %s1, 4
      %s27 = int_to_ptr.vmem [resolvable:$true] %s26
      %29 = dma.vmem_to_smem %s27, 16, [#allocation5], [#allocation6]
    $region9: #{qrnet_forward.1} parent=1 // pred_fallthru
      _
    // Predicated region
    $region10: #{qrnet_forward.1} parent=1 // pred_check
      _
    $region11: #{qrnet_forward.1} parent=1 // pred_check_branch
      %31 = sbr.rel (0) target = $region13
    $region12: #{qrnet_forward.1} parent=1 // pred_region
      _
    $region13: #{qrnet_forward.1} parent=1 // pred_fallthru
      _
    // Predicated region
    $region14: #{qrnet_forward.1} parent=1 // pred_check
      _
    $region15: #{qrnet_forward.1} parent=1 // pred_check_branch
      %33 = sbr.rel (0) target = $region17
    $region16: #{qrnet_forward.1} parent=1 // pred_region
      _
    $region17: #{qrnet_forward.1} parent=1 // pred_fallthru
      _
    // Predicated region
    $region18: #{qrnet_forward.1} parent=1 // pred_check
      _
    $region19: #{qrnet_forward.1} parent=1 // pred_check_branch
      %35 = sbr.rel (0) target = $region21
    $region20: #{qrnet_forward.1} parent=1 // pred_region
      _
    $region21: #{qrnet_forward.1} parent=1 // pred_fallthru
      _
    // Predicated region
    $region22: #{qrnet_forward.1} parent=1 // pred_check
      _
    $region23: #{qrnet_forward.1} parent=1 // pred_check_branch
      %37 = sbr.rel (0) target = $region25
    $region24: #{qrnet_forward.1} parent=1 // pred_region
      _
    $region25: #{qrnet_forward.1} parent=1 // pred_fallthru
      _
    // Predicated region
    $region26: #{qrnet_forward.1} parent=1 // pred_check
      _
    $region27: #{qrnet_forward.1} parent=1 // pred_check_branch
      %39 = sbr.rel (0) target = $region29
    $region28: #{qrnet_forward.1} parent=1 // pred_region
      _
    $region29: #{qrnet_forward.1} parent=1 // pred_fallthru
      _
    // Predicated region
    $region30: #{qrnet_forward.1} parent=1 // pred_check
      _
    $region31: #{qrnet_forward.1} parent=1 // pred_check_branch
      %41 = sbr.rel (0) target = $region33
    $region32: #{qrnet_forward.1} parent=1 // pred_region
      %43 = vsyncadd [#allocation8], 0
      %s45 = sshll.u32 %s7, 4
      %s46 = int_to_ptr.vmem [resolvable:$true] %s45
      %48 = dma.vmem_to_smem %s46, 16, [#allocation7], [#allocation8]
    $region33: #{qrnet_forward.1} parent=1 // pred_fallthru
      _
    // Predicated region
    $region34: #{qrnet_forward.1} parent=1 // pred_check
      _
    $region35: #{qrnet_forward.1} parent=1 // pred_check_branch
      %50 = sbr.rel (0) target = $region37
    $region36: #{qrnet_forward.1} parent=1 // pred_region
      _
    $region37: #{qrnet_forward.1} parent=1 // pred_fallthru
      _
    // Predicated region
    $region38: #{qrnet_forward.1} parent=1 // pred_check
      _
    $region39: #{qrnet_forward.1} parent=1 // pred_check_branch
      %52 = sbr.rel (0) target = $region41
    $region40: #{qrnet_forward.1} parent=1 // pred_region
      %54 = dma.done [#allocation6], 16
    $region41: #{qrnet_forward.1} parent=1 // pred_fallthru
      _
    // Predicated region
    $region42: #{qrnet_forward.1} parent=1 // pred_check
      _
    $region43: #{qrnet_forward.1} parent=1 // pred_check_branch
      %56 = sbr.rel (0) target = $region45
    $region44: #{qrnet_forward.1} parent=1 // pred_region
      %58 = dma.done [#allocation8], 16
    $region45: #{qrnet_forward.1} parent=1 // pred_fallthru
      _
    %59 = sfence
    %s60 = sld [smem:[#allocation5]]
    %v61 = vld [vmem:[%s0] sm:$0xff]
    %v62 = vld [vmem:[%s0 + $0x8] sm:$0xff]
    %v63 = vstv %s60
    %v64 = vmul.f32 %v63, %v61
    %v65 = vmul.f32 %v63, %v62
    %s66 = sld [smem:[#allocation5 + $0x1]]
    %s67 = scalar_lea.vmem %s0, 16
    %v68 = vld [vmem:[%s67] sm:$0xff]
    %v69 = vld [vmem:[%s67 + $0x8] sm:$0xff]
    %v70 = vstv %s66
    %v71 = vmul.f32 %v70, %v68
    %v72 = vmul.f32 %v70, %v69
    %v73 = vadd.f32 %v64, %v71
    %v74 = vadd.f32 %v65, %v72
    %s75 = sld [smem:[#allocation5 + $0x2]]
    %s76 = scalar_lea.vmem %s0, 32
    %v77 = vld [vmem:[%s76] sm:$0xff]
    %v78 = vld [vmem:[%s76 + $0x8] sm:$0xff]
    %v79 = vstv %s75
    %v80 = vmul.f32 %v79, %v77
    %v81 = vmul.f32 %v79, %v78
    %v82 = vadd.f32 %v73, %v80
    %v83 = vadd.f32 %v74, %v81
    %s84 = sld [smem:[#allocation2]]
    %v85 = vstv %s84
    %v86 = vadd.f32 %v82, %v85
    %v87 = vadd.f32 %v83, %v85
    %v88 = vmax.f32 %v86, 0.0
    %v89 = vmax.f32 %v87, 0.0
    %92 = vrot.lane.b32.xlu0 %v88, 127
    %v93 = vpop.permute.xlu0 %92
    %94 = vrot.lane.b32.xlu0 %v89, 127
    %v95 = vpop.permute.xlu0 %94
    %98 = vrot.lane.b32.xlu0 %v88, 126
    %v99 = vpop.permute.xlu0 %98
    %100 = vrot.lane.b32.xlu0 %v89, 126
    %v101 = vpop.permute.xlu0 %100
    %v104 = vld [vmem:[%s3] sm:$0x1]
    %v105 = vperm.slane %v104, 0
    %v106 = vmul.f32 %v105, %v88
    %v107 = vmul.f32 %v105, %v89
    %v108 = vld [vmem:[%s3 + $0x1] sm:$0x1]
    %v109 = vperm.slane %v108, 0
    %v110 = vmul.f32 %v109, %v93
    %v111 = vmul.f32 %v109, %v95
    %v112 = vadd.f32 %v106, %v110
    %v113 = vadd.f32 %v107, %v111
    %v114 = vld [vmem:[%s3 + $0x2] sm:$0x1]
    %v115 = vperm.slane %v114, 0
    %v116 = vmul.f32 %v115, %v99
    %v117 = vmul.f32 %v115, %v101
    %v118 = vadd.f32 %v112, %v116
    %v119 = vadd.f32 %v113, %v117
    %v120 = vld [vmem:[%s3 + $0x3] sm:$0x1]
    %v121 = vperm.slane %v120, 0
    %v122 = vmul.f32 %v121, %v88
    %v123 = vmul.f32 %v121, %v89
    %v124 = vld [vmem:[%s3 + $0x4] sm:$0x1]
    %v125 = vperm.slane %v124, 0
    %v126 = vmul.f32 %v125, %v93
    %v127 = vmul.f32 %v125, %v95
    %v128 = vadd.f32 %v122, %v126
    %v129 = vadd.f32 %v123, %v127
    %v130 = vld [vmem:[%s3 + $0x5] sm:$0x1]
    %v131 = vperm.slane %v130, 0
    %v132 = vmul.f32 %v131, %v99
    %v133 = vmul.f32 %v131, %v101
    %v134 = vadd.f32 %v128, %v132
    %v135 = vadd.f32 %v129, %v133
    %v136 = vld [vmem:[%s3 + $0x6] sm:$0x1]
    %v137 = vperm.slane %v136, 0
    %v138 = vmul.f32 %v137, %v88
    %v139 = vmul.f32 %v137, %v89
    %v140 = vld [vmem:[%s3 + $0x7] sm:$0x1]
    %v141 = vperm.slane %v140, 0
    %v142 = vmul.f32 %v141, %v93
    %v143 = vmul.f32 %v141, %v95
    %v144 = vadd.f32 %v138, %v142
    %v145 = vadd.f32 %v139, %v143
    %v146 = vld [vmem:[%s3 + $0x8] sm:$0x1]
    %v147 = vperm.slane %v146, 0
    %v148 = vmul.f32 %v147, %v99
    %v149 = vmul.f32 %v147, %v101
    %v150 = vadd.f32 %v144, %v148
    %v151 = vadd.f32 %v145, %v149
    %vm154 = vcmask 1046528
    %v155 = vrot.slane %v134, 1
    %v156 = vrot.slane %v135, 1
    %v157 = vsel %vm154, %v155, %v156
    %v161 = vsel %vm154, %v156, %v155
    %v162 = vadd.f32 %v118, %v157
    %v163 = vadd.f32 %v119, %v161
    %vm166 = vcmask 1045504
    %v167 = vrot.slane %v150, 2
    %v168 = vrot.slane %v151, 2
    %v169 = vsel %vm166, %v167, %v168
    %v173 = vsel %vm166, %v168, %v167
    %v174 = vadd.f32 %v162, %v169
    %v175 = vadd.f32 %v163, %v173
    %v176 = vld [vmem:[%s4] sm:$0x1]
    %v178 = vperm.slane %v176, 0
    %v180 = vadd.f32 %v174, %v178
    %v181 = vadd.f32 %v175, %v178
    %v182 = vmax.f32 %v180, 0.0
    %v183 = vmax.f32 %v181, 0.0
    %v184 = vld [vmem:[%s5] sm:$0x1]
    %v186 = vperm.slane %v184, 0
    %v188 = vmul.f32 %v182, %v186
    %v189 = vmul.f32 %v183, %v186
    %192 = vrot.lane.b32.xlu0 %v188, 64
    %v193 = vpop.permute.xlu0 %192
    %194 = vrot.lane.b32.xlu0 %v189, 64
    %v195 = vpop.permute.xlu0 %194
    %v198 = vadd.f32 %v188, %v193
    %v199 = vadd.f32 %v189, %v195
    %202 = vrot.lane.b32.xlu0 %v198, 32
    %v203 = vpop.permute.xlu0 %202
    %204 = vrot.lane.b32.xlu0 %v199, 32
    %v205 = vpop.permute.xlu0 %204
    %v208 = vadd.f32 %v198, %v203
    %v209 = vadd.f32 %v199, %v205
    %212 = vrot.lane.b32.xlu0 %v208, 16
    %v213 = vpop.permute.xlu0 %212
    %214 = vrot.lane.b32.xlu0 %v209, 16
    %v215 = vpop.permute.xlu0 %214
    %v218 = vadd.f32 %v208, %v213
    %v219 = vadd.f32 %v209, %v215
    %s220 = sld [smem:[#allocation3]]
    %v221 = vstv %s220
    %v222 = vadd.f32 %v218, %v221
    %v223 = vadd.f32 %v219, %v221
    %v224 = vmax.f32 %v222, 0.0
    %v225 = vmax.f32 %v223, 0.0
    %228 = vrot.lane.b32.xlu0 %v224, 126
    %v229 = vpop.permute.xlu0 %228
    %230 = vrot.lane.b32.xlu0 %v225, 126
    %v231 = vpop.permute.xlu0 %230
    %234 = vrot.lane.b32.xlu0 %v224, 124
    %v235 = vpop.permute.xlu0 %234
    %236 = vrot.lane.b32.xlu0 %v225, 124
    %v237 = vpop.permute.xlu0 %236
    %s240 = sld [smem:[#allocation7]]
    %v241 = vstv %s240
    %v242 = vmul.f32 %v241, %v224
    %v243 = vmul.f32 %v241, %v225
    %s244 = sld [smem:[#allocation7 + $0x1]]
    %v245 = vstv %s244
    %v246 = vmul.f32 %v245, %v229
    %v247 = vmul.f32 %v245, %v231
    %v248 = vadd.f32 %v242, %v246
    %v249 = vadd.f32 %v243, %v247
    %s250 = sld [smem:[#allocation7 + $0x2]]
    %v251 = vstv %s250
    %v252 = vmul.f32 %v251, %v235
    %v253 = vmul.f32 %v251, %v237
    %v254 = vadd.f32 %v248, %v252
    %v255 = vadd.f32 %v249, %v253
    %s256 = sld [smem:[#allocation7 + $0x3]]
    %v257 = vstv %s256
    %v258 = vmul.f32 %v257, %v224
    %v259 = vmul.f32 %v257, %v225
    %s260 = sld [smem:[#allocation7 + $0x4]]
    %v261 = vstv %s260
    %v262 = vmul.f32 %v261, %v229
    %v263 = vmul.f32 %v261, %v231
    %v264 = vadd.f32 %v258, %v262
    %v265 = vadd.f32 %v259, %v263
    %s266 = sld [smem:[#allocation7 + $0x5]]
    %v267 = vstv %s266
    %v268 = vmul.f32 %v267, %v235
    %v269 = vmul.f32 %v267, %v237
    %v270 = vadd.f32 %v264, %v268
    %v271 = vadd.f32 %v265, %v269
    %s272 = sld [smem:[#allocation7 + $0x6]]
    %v273 = vstv %s272
    %v274 = vmul.f32 %v273, %v224
    %v275 = vmul.f32 %v273, %v225
    %s276 = sld [smem:[#allocation7 + $0x7]]
    %v277 = vstv %s276
    %v278 = vmul.f32 %v277, %v229
    %v279 = vmul.f32 %v277, %v231
    %v280 = vadd.f32 %v274, %v278
    %v281 = vadd.f32 %v275, %v279
    %s282 = sld [smem:[#allocation7 + $0x8]]
    %v283 = vstv %s282
    %v284 = vmul.f32 %v283, %v235
    %v285 = vmul.f32 %v283, %v237
    %v286 = vadd.f32 %v280, %v284
    %v287 = vadd.f32 %v281, %v285
    %v290 = vrot.slane %v270, 2
    %v291 = vrot.slane %v271, 2
    %v292 = vsel %vm166, %v290, %v291
    %v296 = vsel %vm166, %v291, %v290
    %v297 = vadd.f32 %v254, %v292
    %v298 = vadd.f32 %v255, %v296
    %vm301 = vcmask 1043456
    %v302 = vrot.slane %v286, 4
    %v303 = vrot.slane %v287, 4
    %v304 = vsel %vm301, %v302, %v303
    %v308 = vsel %vm301, %v303, %v302
    %v309 = vadd.f32 %v297, %v304
    %v310 = vadd.f32 %v298, %v308
    %s311 = sld [smem:[#allocation4]]
    %v312 = vstv %s311
    %v313 = vadd.f32 %v309, %v312
    %v314 = vadd.f32 %v310, %v312
    %315 = vst [vmem:[%s9] sm:$0xff] %v313
    %316 = vst [vmem:[%s9 + $0x8] sm:$0xff] %v314
    // Predicated region
    $region46: #{qrnet_forward.1} parent=1 // pred_check
      _
    $region47: #{qrnet_forward.1} parent=1 // pred_check_branch
      %318 = sbr.rel (0) target = $region49
    $region48: #{qrnet_forward.1} parent=1 // pred_region
      _
    $region49: #{qrnet_forward.1} parent=1 // pred_fallthru
      _
    // Predicated region
    $region50: #{qrnet_forward.1} parent=1 // pred_check
      _
    $region51: #{qrnet_forward.1} parent=1 // pred_check_branch
      %320 = sbr.rel (0) target = $region53
    $region52: #{qrnet_forward.1} parent=1 // pred_region
      _
    $region53: #{qrnet_forward.1} parent=1 // pred_fallthru
      _
    %321 = vsyncpa [#allocation6], 1
    %322 = vsyncpa [#allocation8], 1

</llo_original>
